<compile_context>
chip_gen: v7x
topology: tpu7x:2x2x1
jax: 0.10.0
libtpu: 0.0.40
codegen_flags: <defaults>
</compile_context>

<pallas_src>
import jax
import jax.numpy as jnp
from jax.experimental import pallas as pl
from jax.experimental.pallas import tpu as pltpu


def _nmf_kernel(u_ref, v_ref, b_ref, o_ref):
    # u_ref/v_ref: (D, tb)   b_ref/o_ref: (1, tb)   -- batch on the lane axis.
    u = u_ref[...].astype(jnp.float32)
    v = v_ref[...].astype(jnp.float32)
    b = b_ref[...].astype(jnp.float32)

    # sigmoid(u) * sigmoid(v) == 1 / ((1 + e^-u) * (1 + e^-v))
    eu = jnp.exp(-u)                                    # EUP
    ev = jnp.exp(-v)                                    # EUP
    prod = 1.0 / ((1.0 + eu) * (1.0 + ev))              # VALU muls + 1 divide

    dot = jnp.sum(prod, axis=0, keepdims=True)          # sublane reduce -> (1, tb)
    o_ref[...] = (dot + jax.nn.sigmoid(b)).astype(o_ref.dtype)


def _round_up(x, m):
    return ((x + m - 1) // m) * m


def nmf_forward(user_emb_table, item_emb_table, item_bias_table,
                user_ids, item_ids, *, block_b=1024):
    """Compute NMFNet forward with the score computation inside a Pallas kernel."""
    B = int(user_ids.shape[0])
    D = int(user_emb_table.shape[1])

    # --- choose a lane tile (multiple of 128) for the batch axis -------------
    B128 = _round_up(max(B, 1), 128)
    # (a) VMEM: 2 inputs x 2 pipeline buffers x (D * tb * 4B) <= ~8 MiB.
    vmem_budget = 8 * 1024 * 1024
    tb_vmem = max(128, (vmem_budget // (16 * max(D, 1))) // 128 * 128)
    # (b) keep >= 4 parallel grid steps when the batch allows it (v7x megacore).
    tb_cores = max(128, (B128 // 4) // 128 * 128)
    tb = min(_round_up(block_b, 128), B128, tb_vmem, tb_cores)
    B_pad = _round_up(B128, tb)
    grid = B_pad // tb

    # --- gather (XLA glue), pad ragged batches, lay batch on the lane axis ---
    pad = B_pad - B
    uid = jnp.pad(user_ids, (0, pad)) if pad else user_ids   # index 0 is valid
    iid = jnp.pad(item_ids, (0, pad)) if pad else item_ids
    u_t = user_emb_table[uid].T                      # (D, B_pad)
    v_t = item_emb_table[iid].T                      # (D, B_pad)
    b_t = item_bias_table[iid].T                     # (1, B_pad)

    out = pl.pallas_call(
        _nmf_kernel,
        out_shape=jax.ShapeDtypeStruct((1, B_pad), jnp.float32),
        grid_spec=pltpu.PrefetchScalarGridSpec(
            num_scalar_prefetch=0,
            grid=(grid,),
            in_specs=[
                pl.BlockSpec((D, tb), lambda i: (0, i)),
                pl.BlockSpec((D, tb), lambda i: (0, i)),
                pl.BlockSpec((1, tb), lambda i: (0, i)),
            ],
            out_specs=pl.BlockSpec((1, tb), lambda i: (0, i)),
        ),
        compiler_params=pltpu.CompilerParams(
            dimension_semantics=("parallel",)),
    )(u_t, v_t, b_t)

    return out[0, :B]                              # (B,), matches torch .squeeze()


def reference_forward(user_emb_table, item_emb_table, item_bias_table,
                      user_ids, item_ids):
    u = user_emb_table[user_ids]
    v = item_emb_table[item_ids]
    b = item_bias_table[item_ids][:, 0]
    dot = jnp.sum(jax.nn.sigmoid(u) * jax.nn.sigmoid(v), axis=1)
    return dot + jax.nn.sigmoid(b)


if __name__ == "__main__":
    # Deterministic, synthetic parameters (ScaledEmbedding ~ N(0, 1/D);
    # ZeroEmbedding = zeros).
    n_users, n_items, embedding_dim = 16, 24, 32
    batch = 8

    key = jax.random.PRNGKey(0)
    k_u, k_i, k_uid, k_iid = jax.random.split(key, 4)

    user_emb_table = (jax.random.normal(k_u, (n_users, embedding_dim), jnp.float32)
                      / embedding_dim)
    item_emb_table = (jax.random.normal(k_i, (n_items, embedding_dim), jnp.float32)
                      / embedding_dim)
    item_bias_table = jnp.zeros((n_items, 1), jnp.float32)     # ZeroEmbedding

    user_ids = jax.random.randint(k_uid, (batch,), 0, n_users, jnp.int32)
    item_ids = jax.random.randint(k_iid, (batch,), 0, n_items, jnp.int32)

    out = nmf_forward(user_emb_table, item_emb_table, item_bias_table,
                      user_ids, item_ids)
    out = jax.block_until_ready(out)
    ref = reference_forward(user_emb_table, item_emb_table, item_bias_table,
                            user_ids, item_ids)
    assert out.shape == (batch,)
    assert jnp.allclose(out, ref, atol=1e-5, rtol=1e-5), (out, ref)

    # Also exercise a ragged batch (padding path) and a multi-step grid.
    batch2 = 300
    k_uid2, k_iid2 = jax.random.split(k_uid)
    user_ids2 = jax.random.randint(k_uid2, (batch2,), 0, n_users, jnp.int32)
    item_ids2 = jax.random.randint(k_iid2, (batch2,), 0, n_items, jnp.int32)
    out2 = jax.block_until_ready(
        nmf_forward(user_emb_table, item_emb_table, item_bias_table,
                    user_ids2, item_ids2))
    ref2 = reference_forward(user_emb_table, item_emb_table, item_bias_table,
                             user_ids2, item_ids2)
    assert out2.shape == (batch2,)
    assert jnp.allclose(out2, ref2, atol=1e-5, rtol=1e-5), (out2, ref2)

    print("KERNEL_OK")
</pallas_src>

<mosaic_0001>
module attributes {stable_mosaic.version = 11 : i64} {
  func.func @_nmf_kernel(%arg0: i32, %arg1: memref<32x128xf32, #tpu.memory_space<vmem>>, %arg2: memref<32x128xf32, #tpu.memory_space<vmem>>, %arg3: memref<1x128xf32, #tpu.memory_space<vmem>>, %arg4: memref<1x128xf32, #tpu.memory_space<vmem>>) attributes {dimension_semantics = [#tpu.dimension_semantics<parallel>], iteration_bounds = array<i64: 1>, scalar_prefetch = 0 : i64, scratch_operands = 0 : i64, tpu.core_type = #tpu.core_type<tc>, window_params = [{transform_indices = @transform_0, window_bounds = array<i64: 32, 128>}, {transform_indices = @transform_1, window_bounds = array<i64: 32, 128>}, {transform_indices = @transform_2, window_bounds = array<i64: 1, 128>}, {transform_indices = @transform_3, window_bounds = array<i64: 1, 128>}]} {
    %c0 = arith.constant 0 : index
    %c0_0 = arith.constant 0 : index
    %0 = vector.load %arg1[%c0, %c0_0] : memref<32x128xf32, #tpu.memory_space<vmem>>, vector<32x128xf32>
    %c0_1 = arith.constant 0 : index
    %c0_2 = arith.constant 0 : index
    %1 = vector.load %arg2[%c0_1, %c0_2] : memref<32x128xf32, #tpu.memory_space<vmem>>, vector<32x128xf32>
    %c0_3 = arith.constant 0 : index
    %c0_4 = arith.constant 0 : index
    %2 = vector.load %arg3[%c0_3, %c0_4] : memref<1x128xf32, #tpu.memory_space<vmem>>, vector<1x128xf32>
    %cst = arith.constant 0.000000e+00 : f32
    %3 = vector.broadcast %cst : f32 to vector<32x128xf32>
    %4 = arith.subf %3, %0 : vector<32x128xf32>
    %5 = math.exp %4 : vector<32x128xf32>
    %cst_5 = arith.constant 0.000000e+00 : f32
    %6 = vector.broadcast %cst_5 : f32 to vector<32x128xf32>
    %7 = arith.subf %6, %1 : vector<32x128xf32>
    %8 = math.exp %7 : vector<32x128xf32>
    %cst_6 = arith.constant 1.000000e+00 : f32
    %9 = vector.broadcast %cst_6 : f32 to vector<32x128xf32>
    %10 = arith.addf %9, %5 : vector<32x128xf32>
    %cst_7 = arith.constant 1.000000e+00 : f32
    %11 = vector.broadcast %cst_7 : f32 to vector<32x128xf32>
    %12 = arith.addf %11, %8 : vector<32x128xf32>
    %13 = arith.mulf %10, %12 : vector<32x128xf32>
    %cst_8 = arith.constant 1.000000e+00 : f32
    %14 = vector.broadcast %cst_8 : f32 to vector<32x128xf32>
    %15 = arith.divf %14, %13 : vector<32x128xf32>
    %cst_9 = arith.constant dense<0.000000e+00> : vector<128xf32>
    %16 = vector.multi_reduction <add>, %15, %cst_9 [0] : vector<32x128xf32> to vector<128xf32>
    %17 = vector.shape_cast %16 : vector<128xf32> to vector<1x128xf32>
    %18 = arith.negf %2 : vector<1x128xf32>
    %19 = math.exp %18 : vector<1x128xf32>
    %cst_10 = arith.constant 1.000000e+00 : f32
    %20 = vector.broadcast %cst_10 : f32 to vector<1x128xf32>
    %21 = arith.addf %20, %19 : vector<1x128xf32>
    %22 = arith.divf %20, %21 : vector<1x128xf32>
    %23 = arith.addf %17, %22 : vector<1x128xf32>
    %c0_11 = arith.constant 0 : index
    %c0_12 = arith.constant 0 : index
    %24 = vector.load %arg4[%c0_11, %c0_12] : memref<1x128xf32, #tpu.memory_space<vmem>>, vector<1x128xf32>
    tpu.vector_store %arg4[%c0_11, %c0_12], %23 {strides = array<i32>} : memref<1x128xf32, #tpu.memory_space<vmem>>, vector<1x128xf32>,
    return
  }
  func.func @transform_0(%arg0: i32) -> (i32, i32) {
    %c0_i32 = arith.constant 0 : i32
    %c0_i32_0 = arith.constant 0 : i32
    return %c0_i32, %arg0 : i32, i32
  }
  func.func @transform_1(%arg0: i32) -> (i32, i32) {
    %c0_i32 = arith.constant 0 : i32
    %c0_i32_0 = arith.constant 0 : i32
    return %c0_i32, %arg0 : i32, i32
  }
  func.func @transform_2(%arg0: i32) -> (i32, i32) {
    %c0_i32 = arith.constant 0 : i32
    %c0_i32_0 = arith.constant 0 : i32
    return %c0_i32, %arg0 : i32, i32
  }
  func.func @transform_3(%arg0: i32) -> (i32, i32) {
    %c0_i32 = arith.constant 0 : i32
    %c0_i32_0 = arith.constant 0 : i32
    return %c0_i32, %arg0 : i32, i32
  }
}

</mosaic_0001>

<llo_original>
// kernel: tpu_custom_call.1
$region0: #{tpu_custom_call.1}
  #allocation0 [shape = 'u32[]', space=smem, size = 0x4, offset = 0x4, fixed_abs, tag = 'smem constant byte address 0x4 - core index']
  #allocation1 [shape = 'u32[144,128]{1,0:T(1,128)}', space=vmem, size = 0x12000, scoped, tag = 'internal scratch']
  %s0 = inlined_call_operand.hbm [shape: f32[32,128], index: 0, kind: input, shape index: {}]
  %s1 = inlined_call_operand.hbm [shape: f32[32,128], index: 1, kind: input, shape index: {}]
  %s2 = inlined_call_operand.vmem [shape: f32[1,128], index: 2, kind: input, shape index: {}]
  %s3 = inlined_call_operand.hbm [shape: f32[1,128], index: 3, kind: output, shape index: {}]
  %s4 = sld [smem:[#allocation0]]
  $region30: #{tpu_custom_call.1} parent=0
    _
  %s6 = ssub.s32 1, %s4
  %s7 = scalar_select 0, %s6, %s4
  $region1: #{tpu_custom_call.1} parent=0
    #allocation2 [shape = 'u8[16384]{0}', space=vmem, size = 0x4000, scoped, tag = 'input window, operand 0, single buffered']
    #allocation3 [shape = 's32[1]{0}', space=sflag, size = 0x4, scoped, tag = 'scoped memory for tpu_custom_call.1']
    #allocation4 [shape = 's32[1]{0}', space=sflag, size = 0x4, scoped, tag = 'scoped memory for tpu_custom_call.1']
    #allocation5 [shape = 'u8[16384]{0}', space=vmem, size = 0x4000, scoped, tag = 'input window, operand 1, single buffered']
    #allocation6 [shape = 's32[1]{0}', space=sflag, size = 0x4, scoped, tag = 'scoped memory for tpu_custom_call.1']
    #allocation7 [shape = 'u8[512]{0}', space=vmem, size = 0x400, scoped, tag = 'output window, operand 0, single buffered']
    %8 = vsyncpa [#allocation3], 0
    %9 = vsyncpa [#allocation6], 0
    %10 = vsyncpa [#allocation4], 0
    // Predicated region
    $region2: #{tpu_custom_call.1} parent=1 // pred_check
      _
    $region3: #{tpu_custom_call.1} parent=1 // pred_check_branch
      %12 = sbr.rel (0) target = $region5
    $region4: #{tpu_custom_call.1} parent=1 // pred_region
      %s14 = ssub.s32 512, 512
      %15 = vsyncadd [#allocation3], %s14
      %s16 = sshll.u32 [#allocation2], 4
      %s17 = int_to_ptr.vmem [resolvable:$true] %s16
      %22 = dma.hbm_to_vmem [thread:$0]  %s0, 512, %s17, [#allocation3], 128, 128, 8
    $region5: #{tpu_custom_call.1} parent=1 // pred_fallthru
      _
    // Predicated region
    $region6: #{tpu_custom_call.1} parent=1 // pred_check
      _
    $region7: #{tpu_custom_call.1} parent=1 // pred_check_branch
      %24 = sbr.rel (0) target = $region9
    $region8: #{tpu_custom_call.1} parent=1 // pred_region
      %s26 = ssub.s32 512, 512
      %27 = vsyncadd [#allocation6], %s26
      %s28 = sshll.u32 [#allocation5], 4
      %s29 = int_to_ptr.vmem [resolvable:$true] %s28
      %34 = dma.hbm_to_vmem [thread:$0]  %s1, 512, %s29, [#allocation6], 128, 128, 8
    $region9: #{tpu_custom_call.1} parent=1 // pred_fallthru
      _
    // Predicated region
    $region10: #{tpu_custom_call.1} parent=1 // pred_check
      _
    $region11: #{tpu_custom_call.1} parent=1 // pred_check_branch
      %36 = sbr.rel (0) target = $region13
    $region12: #{tpu_custom_call.1} parent=1 // pred_region
      _
    $region13: #{tpu_custom_call.1} parent=1 // pred_fallthru
      _
    // Predicated region
    $region14: #{tpu_custom_call.1} parent=1 // pred_check
      _
    $region15: #{tpu_custom_call.1} parent=1 // pred_check_branch
      %38 = sbr.rel (0) target = $region17
    $region16: #{tpu_custom_call.1} parent=1 // pred_region
      %39 = dma.done [#allocation3], 512
    $region17: #{tpu_custom_call.1} parent=1 // pred_fallthru
      _
    // Predicated region
    $region18: #{tpu_custom_call.1} parent=1 // pred_check
      _
    $region19: #{tpu_custom_call.1} parent=1 // pred_check_branch
      %41 = sbr.rel (0) target = $region21
    $region20: #{tpu_custom_call.1} parent=1 // pred_region
      %42 = dma.done [#allocation6], 512
    $region21: #{tpu_custom_call.1} parent=1 // pred_fallthru
      _
    %v43 = vld [vmem:[#allocation2] sm:$0xff]
    %v44 = vld [vmem:[#allocation2 + $0x8] sm:$0xff]
    %v45 = vld [vmem:[#allocation2 + $0x10] sm:$0xff]
    %v46 = vld [vmem:[#allocation2 + $0x18] sm:$0xff]
    %v47 = vld [vmem:[#allocation5] sm:$0xff]
    %v48 = vld [vmem:[#allocation5 + $0x8] sm:$0xff]
    %v49 = vld [vmem:[#allocation5 + $0x10] sm:$0xff]
    %v50 = vld [vmem:[#allocation5 + $0x18] sm:$0xff]
    %v51 = vld [vmem:[%s2] sm:$0x1]
    %v52 = vsub.f32 0.0, %v43
    %v53 = vsub.f32 0.0, %v44
    %v54 = vsub.f32 0.0, %v45
    %v55 = vsub.f32 0.0, %v46
    %v56 = vmul.f32 %v52, 1.442695
    %v57 = vpow.pop %v56
    %v58 = vmul.f32 %v53, 1.442695
    %v59 = vpow.pop %v58
    %v60 = vmul.f32 %v54, 1.442695
    %v61 = vpow.pop %v60
    %v62 = vmul.f32 %v55, 1.442695
    %v63 = vpow.pop %v62
    %v64 = vsub.f32 0.0, %v47
    %v65 = vsub.f32 0.0, %v48
    %v66 = vsub.f32 0.0, %v49
    %v67 = vsub.f32 0.0, %v50
    %v68 = vmul.f32 %v64, 1.442695
    %v69 = vpow.pop %v68
    %v70 = vmul.f32 %v65, 1.442695
    %v71 = vpow.pop %v70
    %v72 = vmul.f32 %v66, 1.442695
    %v73 = vpow.pop %v72
    %v74 = vmul.f32 %v67, 1.442695
    %v75 = vpow.pop %v74
    %v76 = vadd.f32 %v57, 1.0
    %v77 = vadd.f32 %v59, 1.0
    %v78 = vadd.f32 %v61, 1.0
    %v79 = vadd.f32 %v63, 1.0
    %v80 = vadd.f32 %v69, 1.0
    %v81 = vadd.f32 %v71, 1.0
    %v82 = vadd.f32 %v73, 1.0
    %v83 = vadd.f32 %v75, 1.0
    %v84 = vmul.f32 %v76, %v80
    %v85 = vmul.f32 %v77, %v81
    %v86 = vmul.f32 %v78, %v82
    %v87 = vmul.f32 %v79, %v83
    %v88 = vrcp.pop %v84
    %v89 = vmul.f32 1.0, %v88
    %v90 = vrcp.pop %v85
    %v91 = vmul.f32 1.0, %v90
    %v92 = vrcp.pop %v86
    %v93 = vmul.f32 1.0, %v92
    %v94 = vrcp.pop %v87
    %v95 = vmul.f32 1.0, %v94
    %v96 = vadd.f32 %v89, %v91
    %v97 = vadd.f32 %v96, %v93
    %v98 = vadd.f32 %v97, %v95
    %v99 = vrot.slane %v98, 4
    %v100 = vadd.f32 %v98, %v99
    %v101 = vrot.slane %v100, 2
    %v102 = vadd.f32 %v100, %v101
    %v103 = vrot.slane %v102, 1
    %v104 = vadd.f32 %v102, %v103
    %v105 = vxor.u32 %v51, 2147483648
    %v106 = vmul.f32 %v105, 1.442695
    %v107 = vpow.pop %v106
    %v108 = vadd.f32 %v107, 1.0
    %v109 = vrcp.pop %v108
    %v110 = vmul.f32 1.0, %v109
    %v111 = vadd.f32 %v104, %v110
    %112 = vst [vmem:[#allocation7] sm:$0x1] %v111
    // Predicated region
    $region22: #{tpu_custom_call.1} parent=1 // pred_check
      _
    $region23: #{tpu_custom_call.1} parent=1 // pred_check_branch
      %114 = sbr.rel (0) target = $region25
    $region24: #{tpu_custom_call.1} parent=1 // pred_region
      %s116 = ssub.s32 16, 16
      %117 = vsyncadd [#allocation4], %s116
      %s119 = sshll.u32 [#allocation7], 4
      %s120 = int_to_ptr.vmem [resolvable:$true] %s119
      %122 = dma.vmem_to_hbm [thread:$0]  %s120, 16, %s3, [#allocation4]
    $region25: #{tpu_custom_call.1} parent=1 // pred_fallthru
      _
    // Predicated region
    $region26: #{tpu_custom_call.1} parent=1 // pred_check
      _
    $region27: #{tpu_custom_call.1} parent=1 // pred_check_branch
      %124 = sbr.rel (0) target = $region29
    $region28: #{tpu_custom_call.1} parent=1 // pred_region
      %125 = dma.done [#allocation4], 16
    $region29: #{tpu_custom_call.1} parent=1 // pred_fallthru
      _
    %126 = vsyncpa [#allocation3], 1
    %127 = vsyncpa [#allocation6], 1
    %128 = vsyncpa [#allocation4], 1

</llo_original>
